<compile_context>
chip_gen: v7x
topology: tpu7x:2x2x1
jax: 0.10.0
libtpu: 0.0.40
codegen_flags: <defaults>
</compile_context>

<pallas_src>
import itertools

import jax
import jax.numpy as jnp
from jax.experimental import pallas as pl
from jax.experimental.pallas import tpu as pltpu


# ------------------------------------------------------------------ kernel

def _make_group_kernel(n_crops):
    """One fused (pool + backbone + head) matmul per crop of the group."""

    def kernel(*refs):
        x_refs = refs[:n_crops]          # each: (TILE_N, C*HW)  native dtype
        w_ref = refs[n_crops]            # (C*HW, OUT_PAD) f32   (pool+proj+head)
        b_ref = refs[n_crops + 1]        # (1, OUT_PAD)    f32
        o_ref = refs[n_crops + 2]        # (n_crops, TILE_N, OUT_PAD) f32

        w = w_ref[...]
        b = b_ref[...]
        for j in range(n_crops):         # static unroll; each store lane-dense
            o_ref[j] = (
                jnp.dot(x_refs[j][...], w, preferred_element_type=jnp.float32)
                + b
            )

    return kernel


# ------------------------------------------------------------------ tiling

def _vmem_budgets():
    """(x-block budget, scoped vmem limit), generation-conditional."""
    cap = 64 * 1024 * 1024
    try:
        info = pltpu.get_tpu_info()
        cap = int(getattr(info, "vmem_capacity_bytes", cap))
    except Exception:
        pass
    if cap >= 100 * 1024 * 1024:                 # v5e / v6e: 128 MiB physical
        return 40 * 1024 * 1024, 96 * 1024 * 1024
    return 20 * 1024 * 1024, 48 * 1024 * 1024    # v7x: 64 MiB per TensorCore


def _choose_tile_n(batch, n_crops, k_dim, elem_bytes, x_budget_bytes):
    """Batch tile: all n_crops blocks per step, double-buffered, under budget."""
    per_row = max(1, 2 * n_crops * k_dim * elem_bytes)
    t = max(1, x_budget_bytes // per_row)
    if t >= batch:
        # Whole batch fits in one tile.  If the batch is big enough, still keep
        # >= 2 grid steps so DMA/compute pipeline and v7x's 2 TCs both work.
        if batch >= 16 and batch % 16 == 0:
            return batch // 2
        return batch
    t = min(t, batch)
    t = max(8, (t // 8) * 8)                     # sublane-aligned tile
    return t


# --------------------------------------------------------- per-group forward

def group_forward(crops, w_fused_pad, b_fused_pad, x_budget_bytes, vmem_limit_bytes):
    """Fused pool+project+head for all same-resolution crops, no HBM concat."""
    n_crops = len(crops)
    b, c, h, w = crops[0].shape
    for cr in crops:
        # torch.cat requires matching C,H,W; we additionally assume equal batch
        # per crop (true for DINO multi-crop batches).
        assert cr.shape == crops[0].shape, "crops in a group must share shape"
    hw = h * w
    k_dim = c * hw
    out_pad = w_fused_pad.shape[1]

    # Fold the mean pool (1/HW) into the already-fused backbone+head weight:
    # W_exp[c*HW + p, :] = w_fused[c, :] / HW.  Exact (everything is linear).
    # TODO(synk): for a real backbone feature dim, keep W_exp bf16 and K-tile it.
    w_exp = jnp.repeat(w_fused_pad / float(hw), hw, axis=0)   # (C*HW, OUT_PAD)

    # Native dtype, contiguous reshape only -- no extra HBM pass over x.
    x_flat = [cr.reshape(b, k_dim) for cr in crops]

    elem_bytes = jnp.dtype(crops[0].dtype).itemsize
    tile_n = _choose_tile_n(b, n_crops, k_dim, elem_bytes, x_budget_bytes)
    nt = -(-b // tile_n)
    b_rows = nt * tile_n
    if b_rows != b:
        # TODO(synk): masked partial tiles instead of zero-padding the batch.
        x_flat = [jnp.pad(xi, ((0, b_rows - b), (0, 0))) for xi in x_flat]

    in_specs = [pl.BlockSpec((tile_n, k_dim), lambda n: (n, 0))
                for _ in range(n_crops)]
    in_specs.append(pl.BlockSpec((k_dim, out_pad), lambda n: (0, 0)))
    in_specs.append(pl.BlockSpec((1, out_pad), lambda n: (0, 0)))
    out_spec = pl.BlockSpec((n_crops, tile_n, out_pad), lambda n: (0, n, 0))

    out = pl.pallas_call(
        _make_group_kernel(n_crops),
        out_shape=jax.ShapeDtypeStruct((n_crops, b_rows, out_pad), jnp.float32),
        grid_spec=pltpu.PrefetchScalarGridSpec(
            num_scalar_prefetch=0,
            grid=(nt,),
            in_specs=in_specs,
            out_specs=out_spec,
        ),
        compiler_params=pltpu.CompilerParams(
            dimension_semantics=("parallel",),
            vmem_limit_bytes=vmem_limit_bytes,
        ),
    )(*x_flat, w_exp, b_fused_pad)

    # (K, B_pad, OUT_PAD) -> drop pad rows -> (K*B, OUT_PAD): torch.cat order.
    return out[:, :b].reshape(n_crops * b, out_pad)


# ------------------------------------------------------ MultiCropWrapper fwd

def _group_boundaries(x):
    """unique_consecutive(return_counts=True)[1] then cumsum, on static shapes."""
    resolutions = [int(inp.shape[-1]) for inp in x]
    counts, prev = [], None
    for r in resolutions:
        if r == prev:
            counts[-1] += 1
        else:
            counts.append(1)
            prev = r
    return list(itertools.accumulate(counts))


def multi_crop_forward(x, params):
    """Exact semantics of MultiCropWrapper.forward (linear head => head(cat)
    == cat(head), so folding the head into the per-group kernel is exact)."""
    if not isinstance(x, (list, tuple)):
        x = [x]
    idx_crops = _group_boundaries(x)

    out_dim = params["w_h"].shape[1]
    out_pad = max(((out_dim + 127) // 128) * 128, 128)

    # Fold backbone projection + head (both linear: exact) and lane-pad to 128.
    w_fused = params["w_b"] @ params["w_h"]                    # (C, OUT)
    b_fused = params["b_b"] @ params["w_h"] + params["b_h"]    # (1, OUT)
    w_pad = jnp.zeros((w_fused.shape[0], out_pad), jnp.float32).at[:, :out_dim].set(w_fused)
    b_pad = jnp.zeros((1, out_pad), jnp.float32).at[:, :out_dim].set(b_fused)

    x_budget, vmem_limit = _vmem_budgets()

    start_idx, outputs = 0, []
    for end_idx in idx_crops:
        outputs.append(
            group_forward(x[start_idx:end_idx], w_pad, b_pad, x_budget, vmem_limit)
        )
        start_idx = end_idx
    output = jnp.concatenate(outputs, axis=0)    # tiny (N_total, OUT_PAD)
    return output[:, :out_dim]


# ------------------------------------------------------------------- driver

if __name__ == "__main__":
    key = jax.random.PRNGKey(0)
    k_wb, k_bb, k_wh, k_bh, k_x1, k_x2, k_x3, k_x4 = jax.random.split(key, 8)

    B, C = 2, 4          # per-crop batch, channels
    EMBED, OUT = 32, 16  # backbone feature dim, head output dim

    params = {
        "w_b": jax.random.normal(k_wb, (C, EMBED), jnp.float32) * 0.1,
        "b_b": jax.random.normal(k_bb, (1, EMBED), jnp.float32) * 0.01,
        "w_h": jax.random.normal(k_wh, (EMBED, OUT), jnp.float32) * 0.1,
        "b_h": jax.random.normal(k_bh, (1, OUT), jnp.float32) * 0.01,
    }

    # Multi-crop input: 2 global crops (16x16) + 2 local crops (8x8), NCHW f32.
    x = [
        jax.random.normal(k_x1, (B, C, 16, 16), jnp.float32),
        jax.random.normal(k_x2, (B, C, 16, 16), jnp.float32),
        jax.random.normal(k_x3, (B, C, 8, 8), jnp.float32),
        jax.random.normal(k_x4, (B, C, 8, 8), jnp.float32),
    ]

    out = multi_crop_forward(x, params)
    jax.block_until_ready(out)

    # Pure-JAX f32 reference with the exact module semantics: per-group
    # concat -> pool -> backbone projection, concat features, head.
    def ref(x_list, p):
        idx = _group_boundaries(x_list)
        feats, start = [], 0
        for end in idx:
            xcat = jnp.concatenate(
                [xi.reshape(xi.shape[0], xi.shape[1], -1) for xi in x_list[start:end]], 0)
            pooled = jnp.mean(xcat, axis=-1)                 # (Ng, C)
            feats.append(pooled @ p["w_b"] + p["b_b"])
            start = end
        f = jnp.concatenate(feats, 0)
        return f @ p["w_h"] + p["b_h"]

    expected = ref(x, params)
    assert out.shape == (4 * B, OUT), out.shape
    assert jnp.allclose(out, expected, atol=5e-4, rtol=2e-2), (
        float(jnp.max(jnp.abs(out - expected)))
    )

    print("KERNEL_OK")
</pallas_src>

<mosaic_0001>
module attributes {stable_mosaic.version = 11 : i64} {
  func.func @kernel(%arg0: i32, %arg1: memref<2x1024xf32, #tpu.memory_space<vmem>>, %arg2: memref<2x1024xf32, #tpu.memory_space<vmem>>, %arg3: memref<1024x128xf32, #tpu.memory_space<vmem>>, %arg4: memref<1x128xf32, #tpu.memory_space<vmem>>, %arg5: memref<2x2x128xf32, #tpu.memory_space<vmem>>) attributes {dimension_semantics = [#tpu.dimension_semantics<parallel>], iteration_bounds = array<i64: 1>, scalar_prefetch = 0 : i64, scratch_operands = 0 : i64, tpu.core_type = #tpu.core_type<tc>, window_params = [{transform_indices = @transform_0, window_bounds = array<i64: 2, 1024>}, {transform_indices = @transform_1, window_bounds = array<i64: 2, 1024>}, {pipeline_mode = #tpu.pipeline_mode<synchronous>, transform_indices = @transform_2, window_bounds = array<i64: 1024, 128>}, {pipeline_mode = #tpu.pipeline_mode<synchronous>, transform_indices = @transform_3, window_bounds = array<i64: 1, 128>}, {transform_indices = @transform_4, window_bounds = array<i64: 2, 2, 128>}]} {
    %c0 = arith.constant 0 : index
    %c0_0 = arith.constant 0 : index
    %0 = vector.load %arg3[%c0, %c0_0] : memref<1024x128xf32, #tpu.memory_space<vmem>>, vector<1024x128xf32>
    %c0_1 = arith.constant 0 : index
    %c0_2 = arith.constant 0 : index
    %1 = vector.load %arg4[%c0_1, %c0_2] : memref<1x128xf32, #tpu.memory_space<vmem>>, vector<1x128xf32>
    %c0_3 = arith.constant 0 : index
    %c0_4 = arith.constant 0 : index
    %2 = vector.load %arg1[%c0_3, %c0_4] : memref<2x1024xf32, #tpu.memory_space<vmem>>, vector<2x1024xf32>
    %cst = arith.constant dense<0.000000e+00> : vector<2x128xf32>
    %3 = tpu.matmul %2, %0, %cst {dimension_numbers = #tpu.dot_dimension_numbers<[1], [0], [0], [1], [0, 0, 1, 1], [], []>} : vector<2x1024xf32>, vector<1024x128xf32>, vector<2x128xf32> -> vector<2x128xf32>
    %4 = vector.broadcast %1 : vector<1x128xf32> to vector<2x128xf32>
    %5 = arith.addf %3, %4 : vector<2x128xf32>
    %c0_5 = arith.constant 0 : index
    %c0_6 = arith.constant 0 : index
    %c0_7 = arith.constant 0 : index
    %6 = vector.load %arg5[%c0_5, %c0_6, %c0_7] : memref<2x2x128xf32, #tpu.memory_space<vmem>>, vector<1x2x128xf32>
    %7 = vector.shape_cast %6 : vector<1x2x128xf32> to vector<2x128xf32>
    %8 = vector.shape_cast %5 : vector<2x128xf32> to vector<1x2x128xf32>
    tpu.vector_store %arg5[%c0_5, %c0_6, %c0_7], %8 {strides = array<i32>} : memref<2x2x128xf32, #tpu.memory_space<vmem>>, vector<1x2x128xf32>,
    %c0_8 = arith.constant 0 : index
    %c0_9 = arith.constant 0 : index
    %9 = vector.load %arg2[%c0_8, %c0_9] : memref<2x1024xf32, #tpu.memory_space<vmem>>, vector<2x1024xf32>
    %cst_10 = arith.constant dense<0.000000e+00> : vector<2x128xf32>
    %10 = tpu.matmul %9, %0, %cst_10 {dimension_numbers = #tpu.dot_dimension_numbers<[1], [0], [0], [1], [0, 0, 1, 1], [], []>} : vector<2x1024xf32>, vector<1024x128xf32>, vector<2x128xf32> -> vector<2x128xf32>
    %11 = vector.broadcast %1 : vector<1x128xf32> to vector<2x128xf32>
    %12 = arith.addf %10, %11 : vector<2x128xf32>
    %c1 = arith.constant 1 : index
    %c0_11 = arith.constant 0 : index
    %c0_12 = arith.constant 0 : index
    %13 = vector.load %arg5[%c1, %c0_11, %c0_12] : memref<2x2x128xf32, #tpu.memory_space<vmem>>, vector<1x2x128xf32>
    %14 = vector.shape_cast %13 : vector<1x2x128xf32> to vector<2x128xf32>
    %15 = vector.shape_cast %12 : vector<2x128xf32> to vector<1x2x128xf32>
    tpu.vector_store %arg5[%c1, %c0_11, %c0_12], %15 {strides = array<i32>} : memref<2x2x128xf32, #tpu.memory_space<vmem>>, vector<1x2x128xf32>,
    return
  }
  func.func @transform_0(%arg0: i32) -> (i32, i32) {
    %c0_i32 = arith.constant 0 : i32
    %c0_i32_0 = arith.constant 0 : i32
    return %arg0, %c0_i32 : i32, i32
  }
  func.func @transform_1(%arg0: i32) -> (i32, i32) {
    %c0_i32 = arith.constant 0 : i32
    %c0_i32_0 = arith.constant 0 : i32
    return %arg0, %c0_i32 : i32, i32
  }
  func.func @transform_2(%arg0: i32) -> (i32, i32) {
    %c0_i32 = arith.constant 0 : i32
    %c0_i32_0 = arith.constant 0 : i32
    %c0_i32_1 = arith.constant 0 : i32
    return %c0_i32, %c0_i32_0 : i32, i32
  }
  func.func @transform_3(%arg0: i32) -> (i32, i32) {
    %c0_i32 = arith.constant 0 : i32
    %c0_i32_0 = arith.constant 0 : i32
    %c0_i32_1 = arith.constant 0 : i32
    return %c0_i32, %c0_i32_0 : i32, i32
  }
  func.func @transform_4(%arg0: i32) -> (i32, i32, i32) {
    %c0_i32 = arith.constant 0 : i32
    %c0_i32_0 = arith.constant 0 : i32
    %c0_i32_1 = arith.constant 0 : i32
    return %c0_i32, %arg0, %c0_i32_0 : i32, i32, i32
  }
}

</mosaic_0001>

<llo_original>
// kernel: tpu_custom_call.1
$region0: #{tpu_custom_call.1}
  #allocation0 [shape = 'u32[]', space=smem, size = 0x4, offset = 0x4, fixed_abs, tag = 'smem constant byte address 0x4 - core index']
  #allocation1 [shape = 'u32[144,128]{1,0:T(1,128)}', space=vmem, size = 0x12000, scoped, tag = 'internal scratch']
  %s0 = inlined_call_operand.hbm [shape: f32[2,1024], index: 0, kind: input, shape index: {}]
  %s1 = inlined_call_operand.hbm [shape: f32[2,1024], index: 1, kind: input, shape index: {}]
  %s2 = inlined_call_operand.hbm [shape: f32[1024,128], index: 2, kind: input, shape index: {}]
  %s3 = inlined_call_operand.vmem [shape: f32[1,128], index: 3, kind: input, shape index: {}]
  %s4 = inlined_call_operand.hbm [shape: f32[2,2,128], index: 4, kind: output, shape index: {}]
  %s5 = sld [smem:[#allocation0]]
  $region38: #{tpu_custom_call.1} parent=0
    _
  %s7 = ssub.s32 1, %s5
  %s8 = scalar_select 0, %s7, %s5
  $region1: #{tpu_custom_call.1} parent=0
    #allocation2 [shape = 'u8[8192]{0}', space=vmem, size = 0x2000, scoped, tag = 'input window, operand 0, single buffered']
    #allocation3 [shape = 's32[1]{0}', space=sflag, size = 0x4, scoped, tag = 'scoped memory for tpu_custom_call.1']
    #allocation4 [shape = 's32[1]{0}', space=sflag, size = 0x4, scoped, tag = 'scoped memory for tpu_custom_call.1']
    #allocation5 [shape = 'u8[8192]{0}', space=vmem, size = 0x2000, scoped, tag = 'input window, operand 1, single buffered']
    #allocation6 [shape = 's32[1]{0}', space=sflag, size = 0x4, scoped, tag = 'scoped memory for tpu_custom_call.1']
    #allocation7 [shape = 'u8[524288]{0}', space=vmem, size = 0x80000, scoped, tag = 'input window, operand 2, single buffered']
    #allocation8 [shape = 'u8[2048]{0}', space=vmem, size = 0x800, scoped, tag = 'output window, operand 0, single buffered']
    %9 = vsyncpa [#allocation3], 0
    %10 = vsyncpa [#allocation6], 0
    %11 = vsyncpa [#allocation4], 0
    // Predicated region
    $region2: #{tpu_custom_call.1} parent=1 // pred_check
      _
    $region3: #{tpu_custom_call.1} parent=1 // pred_check_branch
      %13 = sbr.rel (0) target = $region5
    $region4: #{tpu_custom_call.1} parent=1 // pred_region
      %s15 = ssub.s32 256, 256
      %16 = vsyncadd [#allocation3], %s15
      %s18 = sshll.u32 [#allocation2], 4
      %s19 = int_to_ptr.vmem [resolvable:$true] %s18
      %21 = dma.hbm_to_vmem [thread:$0]  %s0, 256, %s19, [#allocation3]
    $region5: #{tpu_custom_call.1} parent=1 // pred_fallthru
      _
    // Predicated region
    $region6: #{tpu_custom_call.1} parent=1 // pred_check
      _
    $region7: #{tpu_custom_call.1} parent=1 // pred_check_branch
      %23 = sbr.rel (0) target = $region9
    $region8: #{tpu_custom_call.1} parent=1 // pred_region
      %s25 = ssub.s32 256, 256
      %26 = vsyncadd [#allocation6], %s25
      %s28 = sshll.u32 [#allocation5], 4
      %s29 = int_to_ptr.vmem [resolvable:$true] %s28
      %31 = dma.hbm_to_vmem [thread:$0]  %s1, 256, %s29, [#allocation6]
    $region9: #{tpu_custom_call.1} parent=1 // pred_fallthru
      _
    // Predicated region
    $region10: #{tpu_custom_call.1} parent=1 // pred_check
      _
    $region11: #{tpu_custom_call.1} parent=1 // pred_check_branch
      %33 = sbr.rel (0) target = $region13
    $region12: #{tpu_custom_call.1} parent=1 // pred_region
      %s35 = ssub.s32 16384, 16384
      %36 = vsyncadd [#allocation6], %s35
      %s37 = sshll.u32 [#allocation7], 4
      %s38 = int_to_ptr.vmem [resolvable:$true] %s37
      %43 = dma.hbm_to_vmem [thread:$0]  %s2, 16384, %s38, [#allocation6], 128, 128, 8
    $region13: #{tpu_custom_call.1} parent=1 // pred_fallthru
      _
    // Predicated region
    $region14: #{tpu_custom_call.1} parent=1 // pred_check
      _
    $region15: #{tpu_custom_call.1} parent=1 // pred_check_branch
      %45 = sbr.rel (0) target = $region17
    $region16: #{tpu_custom_call.1} parent=1 // pred_region
      _
    $region17: #{tpu_custom_call.1} parent=1 // pred_fallthru
      _
    // Predicated region
    $region18: #{tpu_custom_call.1} parent=1 // pred_check
      _
    $region19: #{tpu_custom_call.1} parent=1 // pred_check_branch
      %47 = sbr.rel (0) target = $region21
    $region20: #{tpu_custom_call.1} parent=1 // pred_region
      %48 = dma.done [#allocation3], 256
    $region21: #{tpu_custom_call.1} parent=1 // pred_fallthru
      _
    // Predicated region
    $region22: #{tpu_custom_call.1} parent=1 // pred_check
      _
    $region23: #{tpu_custom_call.1} parent=1 // pred_check_branch
      %50 = sbr.rel (0) target = $region25
    $region24: #{tpu_custom_call.1} parent=1 // pred_region
      %51 = dma.done [#allocation6], 256
    $region25: #{tpu_custom_call.1} parent=1 // pred_fallthru
      _
    // Predicated region
    $region26: #{tpu_custom_call.1} parent=1 // pred_check
      _
    $region27: #{tpu_custom_call.1} parent=1 // pred_check_branch
      %53 = sbr.rel (0) target = $region29
    $region28: #{tpu_custom_call.1} parent=1 // pred_region
      %54 = dma.done [#allocation6], 16384
    $region29: #{tpu_custom_call.1} parent=1 // pred_fallthru
      _
    %v55 = vld [vmem:[#allocation7] sm:$0xff]
    %v56 = vld [vmem:[#allocation7 + $0x8] sm:$0xff]
    %v57 = vld [vmem:[#allocation7 + $0x10] sm:$0xff]
    %v58 = vld [vmem:[#allocation7 + $0x18] sm:$0xff]
    %v59 = vld [vmem:[#allocation7 + $0x20] sm:$0xff]
    %v60 = vld [vmem:[#allocation7 + $0x28] sm:$0xff]
    %v61 = vld [vmem:[#allocation7 + $0x30] sm:$0xff]
    %v62 = vld [vmem:[#allocation7 + $0x38] sm:$0xff]
    %v63 = vld [vmem:[#allocation7 + $0x40] sm:$0xff]
    %v64 = vld [vmem:[#allocation7 + $0x48] sm:$0xff]
    %v65 = vld [vmem:[#allocation7 + $0x50] sm:$0xff]
    %v66 = vld [vmem:[#allocation7 + $0x58] sm:$0xff]
    %v67 = vld [vmem:[#allocation7 + $0x60] sm:$0xff]
    %v68 = vld [vmem:[#allocation7 + $0x68] sm:$0xff]
    %v69 = vld [vmem:[#allocation7 + $0x70] sm:$0xff]
    %v70 = vld [vmem:[#allocation7 + $0x78] sm:$0xff]
    %v71 = vld [vmem:[#allocation7 + $0x80] sm:$0xff]
    %v72 = vld [vmem:[#allocation7 + $0x88] sm:$0xff]
    %v73 = vld [vmem:[#allocation7 + $0x90] sm:$0xff]
    %v74 = vld [vmem:[#allocation7 + $0x98] sm:$0xff]
    %v75 = vld [vmem:[#allocation7 + $0xa0] sm:$0xff]
    %v76 = vld [vmem:[#allocation7 + $0xa8] sm:$0xff]
    %v77 = vld [vmem:[#allocation7 + $0xb0] sm:$0xff]
    %v78 = vld [vmem:[#allocation7 + $0xb8] sm:$0xff]
    %v79 = vld [vmem:[#allocation7 + $0xc0] sm:$0xff]
    %v80 = vld [vmem:[#allocation7 + $0xc8] sm:$0xff]
    %v81 = vld [vmem:[#allocation7 + $0xd0] sm:$0xff]
    %v82 = vld [vmem:[#allocation7 + $0xd8] sm:$0xff]
    %v83 = vld [vmem:[#allocation7 + $0xe0] sm:$0xff]
    %v84 = vld [vmem:[#allocation7 + $0xe8] sm:$0xff]
    %v85 = vld [vmem:[#allocation7 + $0xf0] sm:$0xff]
    %v86 = vld [vmem:[#allocation7 + $0xf8] sm:$0xff]
    %v87 = vld [vmem:[#allocation7 + $0x100] sm:$0xff]
    %v88 = vld [vmem:[#allocation7 + $0x108] sm:$0xff]
    %v89 = vld [vmem:[#allocation7 + $0x110] sm:$0xff]
    %v90 = vld [vmem:[#allocation7 + $0x118] sm:$0xff]
    %v91 = vld [vmem:[#allocation7 + $0x120] sm:$0xff]
    %v92 = vld [vmem:[#allocation7 + $0x128] sm:$0xff]
    %v93 = vld [vmem:[#allocation7 + $0x130] sm:$0xff]
    %v94 = vld [vmem:[#allocation7 + $0x138] sm:$0xff]
    %v95 = vld [vmem:[#allocation7 + $0x140] sm:$0xff]
    %v96 = vld [vmem:[#allocation7 + $0x148] sm:$0xff]
    %v97 = vld [vmem:[#allocation7 + $0x150] sm:$0xff]
    %v98 = vld [vmem:[#allocation7 + $0x158] sm:$0xff]
    %v99 = vld [vmem:[#allocation7 + $0x160] sm:$0xff]
    %v100 = vld [vmem:[#allocation7 + $0x168] sm:$0xff]
    %v101 = vld [vmem:[#allocation7 + $0x170] sm:$0xff]
    %v102 = vld [vmem:[#allocation7 + $0x178] sm:$0xff]
    %v103 = vld [vmem:[#allocation7 + $0x180] sm:$0xff]
    %v104 = vld [vmem:[#allocation7 + $0x188] sm:$0xff]
    %v105 = vld [vmem:[#allocation7 + $0x190] sm:$0xff]
    %v106 = vld [vmem:[#allocation7 + $0x198] sm:$0xff]
    %v107 = vld [vmem:[#allocation7 + $0x1a0] sm:$0xff]
    %v108 = vld [vmem:[#allocation7 + $0x1a8] sm:$0xff]
    %v109 = vld [vmem:[#allocation7 + $0x1b0] sm:$0xff]
    %v110 = vld [vmem:[#allocation7 + $0x1b8] sm:$0xff]
    %v111 = vld [vmem:[#allocation7 + $0x1c0] sm:$0xff]
    %v112 = vld [vmem:[#allocation7 + $0x1c8] sm:$0xff]
    %v113 = vld [vmem:[#allocation7 + $0x1d0] sm:$0xff]
    %v114 = vld [vmem:[#allocation7 + $0x1d8] sm:$0xff]
    %v115 = vld [vmem:[#allocation7 + $0x1e0] sm:$0xff]
    %v116 = vld [vmem:[#allocation7 + $0x1e8] sm:$0xff]
    %v117 = vld [vmem:[#allocation7 + $0x1f0] sm:$0xff]
    %v118 = vld [vmem:[#allocation7 + $0x1f8] sm:$0xff]
    %v119 = vld [vmem:[#allocation7 + $0x200] sm:$0xff]
    %v120 = vld [vmem:[#allocation7 + $0x208] sm:$0xff]
    %v121 = vld [vmem:[#allocation7 + $0x210] sm:$0xff]
    %v122 = vld [vmem:[#allocation7 + $0x218] sm:$0xff]
    %v123 = vld [vmem:[#allocation7 + $0x220] sm:$0xff]
    %v124 = vld [vmem:[#allocation7 + $0x228] sm:$0xff]
    %v125 = vld [vmem:[#allocation7 + $0x230] sm:$0xff]
    %v126 = vld [vmem:[#allocation7 + $0x238] sm:$0xff]
    %v127 = vld [vmem:[#allocation7 + $0x240] sm:$0xff]
    %v128 = vld [vmem:[#allocation7 + $0x248] sm:$0xff]
    %v129 = vld [vmem:[#allocation7 + $0x250] sm:$0xff]
    %v130 = vld [vmem:[#allocation7 + $0x258] sm:$0xff]
    %v131 = vld [vmem:[#allocation7 + $0x260] sm:$0xff]
    %v132 = vld [vmem:[#allocation7 + $0x268] sm:$0xff]
    %v133 = vld [vmem:[#allocation7 + $0x270] sm:$0xff]
    %v134 = vld [vmem:[#allocation7 + $0x278] sm:$0xff]
    %v135 = vld [vmem:[#allocation7 + $0x280] sm:$0xff]
    %v136 = vld [vmem:[#allocation7 + $0x288] sm:$0xff]
    %v137 = vld [vmem:[#allocation7 + $0x290] sm:$0xff]
    %v138 = vld [vmem:[#allocation7 + $0x298] sm:$0xff]
    %v139 = vld [vmem:[#allocation7 + $0x2a0] sm:$0xff]
    %v140 = vld [vmem:[#allocation7 + $0x2a8] sm:$0xff]
    %v141 = vld [vmem:[#allocation7 + $0x2b0] sm:$0xff]
    %v142 = vld [vmem:[#allocation7 + $0x2b8] sm:$0xff]
    %v143 = vld [vmem:[#allocation7 + $0x2c0] sm:$0xff]
    %v144 = vld [vmem:[#allocation7 + $0x2c8] sm:$0xff]
    %v145 = vld [vmem:[#allocation7 + $0x2d0] sm:$0xff]
    %v146 = vld [vmem:[#allocation7 + $0x2d8] sm:$0xff]
    %v147 = vld [vmem:[#allocation7 + $0x2e0] sm:$0xff]
    %v148 = vld [vmem:[#allocation7 + $0x2e8] sm:$0xff]
    %v149 = vld [vmem:[#allocation7 + $0x2f0] sm:$0xff]
    %v150 = vld [vmem:[#allocation7 + $0x2f8] sm:$0xff]
    %v151 = vld [vmem:[#allocation7 + $0x300] sm:$0xff]
    %v152 = vld [vmem:[#allocation7 + $0x308] sm:$0xff]
    %v153 = vld [vmem:[#allocation7 + $0x310] sm:$0xff]
    %v154 = vld [vmem:[#allocation7 + $0x318] sm:$0xff]
    %v155 = vld [vmem:[#allocation7 + $0x320] sm:$0xff]
    %v156 = vld [vmem:[#allocation7 + $0x328] sm:$0xff]
    %v157 = vld [vmem:[#allocation7 + $0x330] sm:$0xff]
    %v158 = vld [vmem:[#allocation7 + $0x338] sm:$0xff]
    %v159 = vld [vmem:[#allocation7 + $0x340] sm:$0xff]
    %v160 = vld [vmem:[#allocation7 + $0x348] sm:$0xff]
    %v161 = vld [vmem:[#allocation7 + $0x350] sm:$0xff]
    %v162 = vld [vmem:[#allocation7 + $0x358] sm:$0xff]
    %v163 = vld [vmem:[#allocation7 + $0x360] sm:$0xff]
    %v164 = vld [vmem:[#allocation7 + $0x368] sm:$0xff]
    %v165 = vld [vmem:[#allocation7 + $0x370] sm:$0xff]
    %v166 = vld [vmem:[#allocation7 + $0x378] sm:$0xff]
    %v167 = vld [vmem:[#allocation7 + $0x380] sm:$0xff]
    %v168 = vld [vmem:[#allocation7 + $0x388] sm:$0xff]
    %v169 = vld [vmem:[#allocation7 + $0x390] sm:$0xff]
    %v170 = vld [vmem:[#allocation7 + $0x398] sm:$0xff]
    %v171 = vld [vmem:[#allocation7 + $0x3a0] sm:$0xff]
    %v172 = vld [vmem:[#allocation7 + $0x3a8] sm:$0xff]
    %v173 = vld [vmem:[#allocation7 + $0x3b0] sm:$0xff]
    %v174 = vld [vmem:[#allocation7 + $0x3b8] sm:$0xff]
    %v175 = vld [vmem:[#allocation7 + $0x3c0] sm:$0xff]
    %v176 = vld [vmem:[#allocation7 + $0x3c8] sm:$0xff]
    %v177 = vld [vmem:[#allocation7 + $0x3d0] sm:$0xff]
    %v178 = vld [vmem:[#allocation7 + $0x3d8] sm:$0xff]
    %v179 = vld [vmem:[#allocation7 + $0x3e0] sm:$0xff]
    %v180 = vld [vmem:[#allocation7 + $0x3e8] sm:$0xff]
    %v181 = vld [vmem:[#allocation7 + $0x3f0] sm:$0xff]
    %v182 = vld [vmem:[#allocation7 + $0x3f8] sm:$0xff]
    %v183 = vld [vmem:[%s3] sm:$0x1]
    %v184 = vld [vmem:[#allocation2] sm:$0xff]
    %v185 = vld [vmem:[#allocation2 + $0x8] sm:$0xff]
    %v187 = vlaneseq
    %v188 = vshrl.u32 %v187, 7
    %v189 = vsub.s32 0, %v188
    %v190 = vrot.slane %v183, %v189
    %v194 = vcombine.high %v184, %v184
    %v196 = vunpack.c.l.s4 1983009808
    %v197 = vunpack.c.0.s8 %v196
    %v198 = vlaneseq
    %v199 = vshrl.u32 %v198, 7
    %v200 = vsub.s32 %v197, %v199
    %v201 = vrot.slane %v184, %v200
    %v203 = vunpack.c.l.s4 1983009808
    %v204 = vunpack.c.0.s8 %v203
    %v205 = vlaneseq
    %v206 = vshrl.u32 %v205, 7
    %v207 = vsub.s32 %v204, %v206
    %v208 = vrot.slane %v194, %v207
    %v209 = vcombine.high %v201, %v201
    %v210 = vcombine.high %v208, %v208
    %v211 = vcombine.high %v185, %v185
    %v213 = vunpack.c.l.s4 1983009808
    %v214 = vunpack.c.0.s8 %v213
    %v215 = vlaneseq
    %v216 = vshrl.u32 %v215, 7
    %v217 = vsub.s32 %v214, %v216
    %v218 = vrot.slane %v185, %v217
    %v220 = vunpack.c.l.s4 1983009808
    %v221 = vunpack.c.0.s8 %v220
    %v222 = vlaneseq
    %v223 = vshrl.u32 %v222, 7
    %v224 = vsub.s32 %v221, %v223
    %v225 = vrot.slane %v211, %v224
    %v226 = vcombine.high %v218, %v218
    %v227 = vcombine.high %v225, %v225
    %236 = vmatprep.subr.mxu0 0.0
    %237 = vmatpush1.msra.mxu0 %v55
    %238 = vmatprep.subr.mxu0 0.0
    %239 = vmatpush1.msra.mxu0 %v56
    %240 = vmatprep.subr.mxu0 0.0
    %241 = vmatpush1.msra.mxu0 %v57
    %242 = vmatprep.subr.mxu0 0.0
    %243 = vmatpush1.msra.mxu0 %v58
    %244 = vmatprep.subr.mxu0 0.0
    %245 = vmatpush1.msra.mxu0 %v59
    %246 = vmatprep.subr.mxu0 0.0
    %247 = vmatpush1.msra.mxu0 %v60
    %248 = vmatprep.subr.mxu0 0.0
    %249 = vmatpush1.msra.mxu0 %v61
    %250 = vmatprep.subr.mxu0 0.0
    %251 = vmatpush1.msra.mxu0 %v62
    %252 = vmatprep.subr.mxu0 0.0
    %253 = vmatpush1.msra.mxu0 %v63
    %254 = vmatprep.subr.mxu0 0.0
    %255 = vmatpush1.msra.mxu0 %v64
    %256 = vmatprep.subr.mxu0 0.0
    %257 = vmatpush1.msra.mxu0 %v65
    %258 = vmatprep.subr.mxu0 0.0
    %259 = vmatpush1.msra.mxu0 %v66
    %260 = vmatprep.subr.mxu0 0.0
    %261 = vmatpush1.msra.mxu0 %v67
    %262 = vmatprep.subr.mxu0 0.0
    %263 = vmatpush1.msra.mxu0 %v68
    %264 = vmatprep.subr.mxu0 0.0
    %265 = vmatpush1.msra.mxu0 %v69
    %266 = vmatprep.subr.mxu0 0.0
    %267 = vmatpush1.msra.mxu0 %v70
    %268 = vmatprep.subr.mxu0 0.0
    %269 = vmatpush1.msra.mxu0 %v71
    %270 = vmatprep.subr.mxu0 0.0
    %271 = vmatpush1.msra.mxu0 %v72
    %272 = vmatprep.subr.mxu0 0.0
    %273 = vmatpush1.msra.mxu0 %v73
    %274 = vmatprep.subr.mxu0 0.0
    %275 = vmatpush1.msra.mxu0 %v74
    %276 = vmatprep.subr.mxu0 0.0
    %277 = vmatpush1.msra.mxu0 %v75
    %278 = vmatprep.subr.mxu0 0.0
    %279 = vmatpush1.msra.mxu0 %v76
    %280 = vmatprep.subr.mxu0 0.0
    %281 = vmatpush1.msra.mxu0 %v77
    %282 = vmatprep.subr.mxu0 0.0
    %283 = vmatpush1.msra.mxu0 %v78
    %284 = vmatprep.subr.mxu0 0.0
    %285 = vmatpush1.msra.mxu0 %v79
    %286 = vmatprep.subr.mxu0 0.0
    %287 = vmatpush1.msra.mxu0 %v80
    %288 = vmatprep.subr.mxu0 0.0
    %289 = vmatpush1.msra.mxu0 %v81
    %290 = vmatprep.subr.mxu0 0.0
    %291 = vmatpush1.msra.mxu0 %v82
    %292 = vmatprep.subr.mxu0 0.0
    %293 = vmatpush1.msra.mxu0 %v83
    %294 = vmatprep.subr.mxu0 0.0
    %295 = vmatpush1.msra.mxu0 %v84
    %296 = vmatprep.subr.mxu0 0.0
    %297 = vmatpush1.msra.mxu0 %v85
    %298 = vmatprep.subr.mxu0 0.0
    %299 = vmatpush1.msra.mxu0 %v86
    %300 = vmatprep.mubr.f32.mxu0 %v209
    %301 = vmatmul.mubr.f32.gmra.mrb[0].mxu0 %v201
    %v302 = vpop.f32.mrb[0].mxu0
    %v303 = vadd.f32 %v190, %v302
    %v304 = vpop.f32.mrb[0].mxu0
    %305 = vdwg.mxu0
    %306 = vmatprep.subr.mxu0 0.0
    %307 = vmatpush1.msra.mxu0 %v87
    %308 = vmatprep.subr.mxu0 0.0
    %309 = vmatpush1.msra.mxu0 %v88
    %310 = vmatprep.subr.mxu0 0.0
    %311 = vmatpush1.msra.mxu0 %v89
    %312 = vmatprep.subr.mxu0 0.0
    %313 = vmatpush1.msra.mxu0 %v90
    %314 = vmatprep.subr.mxu0 0.0
    %315 = vmatpush1.msra.mxu0 %v91
    %316 = vmatprep.subr.mxu0 0.0
    %317 = vmatpush1.msra.mxu0 %v92
    %318 = vmatprep.subr.mxu0 0.0
    %319 = vmatpush1.msra.mxu0 %v93
    %320 = vmatprep.subr.mxu0 0.0
    %321 = vmatpush1.msra.mxu0 %v94
    %322 = vmatprep.subr.mxu0 0.0
    %323 = vmatpush1.msra.mxu0 %v95
    %324 = vmatprep.subr.mxu0 0.0
    %325 = vmatpush1.msra.mxu0 %v96
    %326 = vmatprep.subr.mxu0 0.0
    %327 = vmatpush1.msra.mxu0 %v97
    %328 = vmatprep.subr.mxu0 0.0
    %329 = vmatpush1.msra.mxu0 %v98
    %330 = vmatprep.subr.mxu0 0.0
    %331 = vmatpush1.msra.mxu0 %v99
    %332 = vmatprep.subr.mxu0 0.0
    %333 = vmatpush1.msra.mxu0 %v100
    %334 = vmatprep.subr.mxu0 0.0
    %335 = vmatpush1.msra.mxu0 %v101
    %336 = vmatprep.subr.mxu0 0.0
    %337 = vmatpush1.msra.mxu0 %v102
    %338 = vmatprep.subr.mxu0 0.0
    %339 = vmatpush1.msra.mxu0 %v103
    %340 = vmatprep.subr.mxu0 0.0
    %341 = vmatpush1.msra.mxu0 %v104
    %342 = vmatprep.subr.mxu0 0.0
    %343 = vmatpush1.msra.mxu0 %v105
    %344 = vmatprep.subr.mxu0 0.0
    %345 = vmatpush1.msra.mxu0 %v106
    %346 = vmatprep.subr.mxu0 0.0
    %347 = vmatpush1.msra.mxu0 %v107
    %348 = vmatprep.subr.mxu0 0.0
    %349 = vmatpush1.msra.mxu0 %v108
    %350 = vmatprep.subr.mxu0 0.0
    %351 = vmatpush1.msra.mxu0 %v109
    %352 = vmatprep.subr.mxu0 0.0
    %353 = vmatpush1.msra.mxu0 %v110
    %354 = vmatprep.subr.mxu0 0.0
    %355 = vmatpush1.msra.mxu0 %v111
    %356 = vmatprep.subr.mxu0 0.0
    %357 = vmatpush1.msra.mxu0 %v112
    %358 = vmatprep.subr.mxu0 0.0
    %359 = vmatpush1.msra.mxu0 %v113
    %360 = vmatprep.subr.mxu0 0.0
    %361 = vmatpush1.msra.mxu0 %v114
    %362 = vmatprep.subr.mxu0 0.0
    %363 = vmatpush1.msra.mxu0 %v115
    %364 = vmatprep.subr.mxu0 0.0
    %365 = vmatpush1.msra.mxu0 %v116
    %366 = vmatprep.subr.mxu0 0.0
    %367 = vmatpush1.msra.mxu0 %v117
    %368 = vmatprep.subr.mxu0 0.0
    %369 = vmatpush1.msra.mxu0 %v118
    %370 = vmatprep.mubr.f32.mxu0 %v210
    %371 = vmatmul.mubr.f32.gmra.mrb[0].mxu0 %v208
    %v372 = vpop.f32.mrb[0].mxu0
    %v373 = vadd.f32 %v303, %v372
    %v374 = vpop.f32.mrb[0].mxu0
    %375 = vdwg.mxu0
    %376 = vmatprep.subr.mxu0 0.0
    %377 = vmatpush1.msra.mxu0 %v119
    %378 = vmatprep.subr.mxu0 0.0
    %379 = vmatpush1.msra.mxu0 %v120
    %380 = vmatprep.subr.mxu0 0.0
    %381 = vmatpush1.msra.mxu0 %v121
    %382 = vmatprep.subr.mxu0 0.0
    %383 = vmatpush1.msra.mxu0 %v122
    %384 = vmatprep.subr.mxu0 0.0
    %385 = vmatpush1.msra.mxu0 %v123
    %386 = vmatprep.subr.mxu0 0.0
    %387 = vmatpush1.msra.mxu0 %v124
    %388 = vmatprep.subr.mxu0 0.0
    %389 = vmatpush1.msra.mxu0 %v125
    %390 = vmatprep.subr.mxu0 0.0
    %391 = vmatpush1.msra.mxu0 %v126
    %392 = vmatprep.subr.mxu0 0.0
    %393 = vmatpush1.msra.mxu0 %v127
    %394 = vmatprep.subr.mxu0 0.0
    %395 = vmatpush1.msra.mxu0 %v128
    %396 = vmatprep.subr.mxu0 0.0
    %397 = vmatpush1.msra.mxu0 %v129
    %398 = vmatprep.subr.mxu0 0.0
    %399 = vmatpush1.msra.mxu0 %v130
    %400 = vmatprep.subr.mxu0 0.0
    %401 = vmatpush1.msra.mxu0 %v131
    %402 = vmatprep.subr.mxu0 0.0
    %403 = vmatpush1.msra.mxu0 %v132
    %404 = vmatprep.subr.mxu0 0.0
    %405 = vmatpush1.msra.mxu0 %v133
    %406 = vmatprep.subr.mxu0 0.0
    %407 = vmatpush1.msra.mxu0 %v134
    %408 = vmatprep.subr.mxu0 0.0
    %409 = vmatpush1.msra.mxu0 %v135
    %410 = vmatprep.subr.mxu0 0.0
    %411 = vmatpush1.msra.mxu0 %v136
    %412 = vmatprep.subr.mxu0 0.0
    %413 = vmatpush1.msra.mxu0 %v137
    %414 = vmatprep.subr.mxu0 0.0
    %415 = vmatpush1.msra.mxu0 %v138
    %416 = vmatprep.subr.mxu0 0.0
    %417 = vmatpush1.msra.mxu0 %v139
    %418 = vmatprep.subr.mxu0 0.0
    %419 = vmatpush1.msra.mxu0 %v140
    %420 = vmatprep.subr.mxu0 0.0
    %421 = vmatpush1.msra.mxu0 %v141
    %422 = vmatprep.subr.mxu0 0.0
    %423 = vmatpush1.msra.mxu0 %v142
    %424 = vmatprep.subr.mxu0 0.0
    %425 = vmatpush1.msra.mxu0 %v143
    %426 = vmatprep.subr.mxu0 0.0
    %427 = vmatpush1.msra.mxu0 %v144
    %428 = vmatprep.subr.mxu0 0.0
    %429 = vmatpush1.msra.mxu0 %v145
    %430 = vmatprep.subr.mxu0 0.0
    %431 = vmatpush1.msra.mxu0 %v146
    %432 = vmatprep.subr.mxu0 0.0
    %433 = vmatpush1.msra.mxu0 %v147
    %434 = vmatprep.subr.mxu0 0.0
    %435 = vmatpush1.msra.mxu0 %v148
    %436 = vmatprep.subr.mxu0 0.0
    %437 = vmatpush1.msra.mxu0 %v149
    %438 = vmatprep.subr.mxu0 0.0
    %439 = vmatpush1.msra.mxu0 %v150
    %440 = vmatprep.mubr.f32.mxu0 %v226
    %441 = vmatmul.mubr.f32.gmra.mrb[0].mxu0 %v218
    %v442 = vpop.f32.mrb[0].mxu0
    %v443 = vadd.f32 %v373, %v442
    %v444 = vpop.f32.mrb[0].mxu0
    %445 = vdwg.mxu0
    %446 = vmatprep.subr.mxu0 0.0
    %447 = vmatpush1.msra.mxu0 %v151
    %448 = vmatprep.subr.mxu0 0.0
    %449 = vmatpush1.msra.mxu0 %v152
    %450 = vmatprep.subr.mxu0 0.0
    %451 = vmatpush1.msra.mxu0 %v153
    %452 = vmatprep.subr.mxu0 0.0
    %453 = vmatpush1.msra.mxu0 %v154
    %454 = vmatprep.subr.mxu0 0.0
    %455 = vmatpush1.msra.mxu0 %v155
    %456 = vmatprep.subr.mxu0 0.0
    %457 = vmatpush1.msra.mxu0 %v156
    %458 = vmatprep.subr.mxu0 0.0
    %459 = vmatpush1.msra.mxu0 %v157
    %460 = vmatprep.subr.mxu0 0.0
    %461 = vmatpush1.msra.mxu0 %v158
    %462 = vmatprep.subr.mxu0 0.0
    %463 = vmatpush1.msra.mxu0 %v159
    %464 = vmatprep.subr.mxu0 0.0
    %465 = vmatpush1.msra.mxu0 %v160
    %466 = vmatprep.subr.mxu0 0.0
    %467 = vmatpush1.msra.mxu0 %v161
    %468 = vmatprep.subr.mxu0 0.0
    %469 = vmatpush1.msra.mxu0 %v162
    %470 = vmatprep.subr.mxu0 0.0
    %471 = vmatpush1.msra.mxu0 %v163
    %472 = vmatprep.subr.mxu0 0.0
    %473 = vmatpush1.msra.mxu0 %v164
    %474 = vmatprep.subr.mxu0 0.0
    %475 = vmatpush1.msra.mxu0 %v165
    %476 = vmatprep.subr.mxu0 0.0
    %477 = vmatpush1.msra.mxu0 %v166
    %478 = vmatprep.subr.mxu0 0.0
    %479 = vmatpush1.msra.mxu0 %v167
    %480 = vmatprep.subr.mxu0 0.0
    %481 = vmatpush1.msra.mxu0 %v168
    %482 = vmatprep.subr.mxu0 0.0
    %483 = vmatpush1.msra.mxu0 %v169
    %484 = vmatprep.subr.mxu0 0.0
    %485 = vmatpush1.msra.mxu0 %v170
    %486 = vmatprep.subr.mxu0 0.0
    %487 = vmatpush1.msra.mxu0 %v171
    %488 = vmatprep.subr.mxu0 0.0
    %489 = vmatpush1.msra.mxu0 %v172
    %490 = vmatprep.subr.mxu0 0.0
    %491 = vmatpush1.msra.mxu0 %v173
    %492 = vmatprep.subr.mxu0 0.0
    %493 = vmatpush1.msra.mxu0 %v174
    %494 = vmatprep.subr.mxu0 0.0
    %495 = vmatpush1.msra.mxu0 %v175
    %496 = vmatprep.subr.mxu0 0.0
    %497 = vmatpush1.msra.mxu0 %v176
    %498 = vmatprep.subr.mxu0 0.0
    %499 = vmatpush1.msra.mxu0 %v177
    %500 = vmatprep.subr.mxu0 0.0
    %501 = vmatpush1.msra.mxu0 %v178
    %502 = vmatprep.subr.mxu0 0.0
    %503 = vmatpush1.msra.mxu0 %v179
    %504 = vmatprep.subr.mxu0 0.0
    %505 = vmatpush1.msra.mxu0 %v180
    %506 = vmatprep.subr.mxu0 0.0
    %507 = vmatpush1.msra.mxu0 %v181
    %508 = vmatprep.subr.mxu0 0.0
    %509 = vmatpush1.msra.mxu0 %v182
    %510 = vmatprep.mubr.f32.mxu0 %v227
    %511 = vmatmul.mubr.f32.gmra.mrb[0].mxu0 %v225
    %v512 = vpop.f32.mrb[0].mxu0
    %v513 = vadd.f32 %v443, %v512
    %v514 = vpop.f32.mrb[0].mxu0
    %515 = vdwg.mxu0
    %516 = vst [vmem:[#allocation8] sm:$0x3] %v513
    %v517 = vld [vmem:[#allocation5] sm:$0xff]
    %v518 = vld [vmem:[#allocation5 + $0x8] sm:$0xff]
    %v521 = vcombine.high %v517, %v517
    %v523 = vunpack.c.l.s4 1983009808
    %v524 = vunpack.c.0.s8 %v523
    %v525 = vlaneseq
    %v526 = vshrl.u32 %v525, 7
    %v527 = vsub.s32 %v524, %v526
    %v528 = vrot.slane %v517, %v527
    %v530 = vunpack.c.l.s4 1983009808
    %v531 = vunpack.c.0.s8 %v530
    %v532 = vlaneseq
    %v533 = vshrl.u32 %v532, 7
    %v534 = vsub.s32 %v531, %v533
    %v535 = vrot.slane %v521, %v534
    %v536 = vcombine.high %v528, %v528
    %v537 = vcombine.high %v535, %v535
    %v538 = vcombine.high %v518, %v518
    %v540 = vunpack.c.l.s4 1983009808
    %v541 = vunpack.c.0.s8 %v540
    %v542 = vlaneseq
    %v543 = vshrl.u32 %v542, 7
    %v544 = vsub.s32 %v541, %v543
    %v545 = vrot.slane %v518, %v544
    %v547 = vunpack.c.l.s4 1983009808
    %v548 = vunpack.c.0.s8 %v547
    %v549 = vlaneseq
    %v550 = vshrl.u32 %v549, 7
    %v551 = vsub.s32 %v548, %v550
    %v552 = vrot.slane %v538, %v551
    %v553 = vcombine.high %v545, %v545
    %v554 = vcombine.high %v552, %v552
    %563 = vmatprep.subr.mxu0 0.0
    %564 = vmatpush1.msra.mxu0 %v55
    %565 = vmatprep.subr.mxu0 0.0
    %566 = vmatpush1.msra.mxu0 %v56
    %567 = vmatprep.subr.mxu0 0.0
    %568 = vmatpush1.msra.mxu0 %v57
    %569 = vmatprep.subr.mxu0 0.0
    %570 = vmatpush1.msra.mxu0 %v58
    %571 = vmatprep.subr.mxu0 0.0
    %572 = vmatpush1.msra.mxu0 %v59
    %573 = vmatprep.subr.mxu0 0.0
    %574 = vmatpush1.msra.mxu0 %v60
    %575 = vmatprep.subr.mxu0 0.0
    %576 = vmatpush1.msra.mxu0 %v61
    %577 = vmatprep.subr.mxu0 0.0
    %578 = vmatpush1.msra.mxu0 %v62
    %579 = vmatprep.subr.mxu0 0.0
    %580 = vmatpush1.msra.mxu0 %v63
    %581 = vmatprep.subr.mxu0 0.0
    %582 = vmatpush1.msra.mxu0 %v64
    %583 = vmatprep.subr.mxu0 0.0
    %584 = vmatpush1.msra.mxu0 %v65
    %585 = vmatprep.subr.mxu0 0.0
    %586 = vmatpush1.msra.mxu0 %v66
    %587 = vmatprep.subr.mxu0 0.0
    %588 = vmatpush1.msra.mxu0 %v67
    %589 = vmatprep.subr.mxu0 0.0
    %590 = vmatpush1.msra.mxu0 %v68
    %591 = vmatprep.subr.mxu0 0.0
    %592 = vmatpush1.msra.mxu0 %v69
    %593 = vmatprep.subr.mxu0 0.0
    %594 = vmatpush1.msra.mxu0 %v70
    %595 = vmatprep.subr.mxu0 0.0
    %596 = vmatpush1.msra.mxu0 %v71
    %597 = vmatprep.subr.mxu0 0.0
    %598 = vmatpush1.msra.mxu0 %v72
    %599 = vmatprep.subr.mxu0 0.0
    %600 = vmatpush1.msra.mxu0 %v73
    %601 = vmatprep.subr.mxu0 0.0
    %602 = vmatpush1.msra.mxu0 %v74
    %603 = vmatprep.subr.mxu0 0.0
    %604 = vmatpush1.msra.mxu0 %v75
    %605 = vmatprep.subr.mxu0 0.0
    %606 = vmatpush1.msra.mxu0 %v76
    %607 = vmatprep.subr.mxu0 0.0
    %608 = vmatpush1.msra.mxu0 %v77
    %609 = vmatprep.subr.mxu0 0.0
    %610 = vmatpush1.msra.mxu0 %v78
    %611 = vmatprep.subr.mxu0 0.0
    %612 = vmatpush1.msra.mxu0 %v79
    %613 = vmatprep.subr.mxu0 0.0
    %614 = vmatpush1.msra.mxu0 %v80
    %615 = vmatprep.subr.mxu0 0.0
    %616 = vmatpush1.msra.mxu0 %v81
    %617 = vmatprep.subr.mxu0 0.0
    %618 = vmatpush1.msra.mxu0 %v82
    %619 = vmatprep.subr.mxu0 0.0
    %620 = vmatpush1.msra.mxu0 %v83
    %621 = vmatprep.subr.mxu0 0.0
    %622 = vmatpush1.msra.mxu0 %v84
    %623 = vmatprep.subr.mxu0 0.0
    %624 = vmatpush1.msra.mxu0 %v85
    %625 = vmatprep.subr.mxu0 0.0
    %626 = vmatpush1.msra.mxu0 %v86
    %627 = vmatprep.mubr.f32.mxu0 %v536
    %628 = vmatmul.mubr.f32.gmra.mrb[0].mxu0 %v528
    %v629 = vpop.f32.mrb[0].mxu0
    %v630 = vadd.f32 %v190, %v629
    %v631 = vpop.f32.mrb[0].mxu0
    %632 = vdwg.mxu0
    %633 = vmatprep.subr.mxu0 0.0
    %634 = vmatpush1.msra.mxu0 %v87
    %635 = vmatprep.subr.mxu0 0.0
    %636 = vmatpush1.msra.mxu0 %v88
    %637 = vmatprep.subr.mxu0 0.0
    %638 = vmatpush1.msra.mxu0 %v89
    %639 = vmatprep.subr.mxu0 0.0
    %640 = vmatpush1.msra.mxu0 %v90
    %641 = vmatprep.subr.mxu0 0.0
    %642 = vmatpush1.msra.mxu0 %v91
    %643 = vmatprep.subr.mxu0 0.0
    %644 = vmatpush1.msra.mxu0 %v92
    %645 = vmatprep.subr.mxu0 0.0
    %646 = vmatpush1.msra.mxu0 %v93
    %647 = vmatprep.subr.mxu0 0.0
    %648 = vmatpush1.msra.mxu0 %v94
    %649 = vmatprep.subr.mxu0 0.0
    %650 = vmatpush1.msra.mxu0 %v95
    %651 = vmatprep.subr.mxu0 0.0
    %652 = vmatpush1.msra.mxu0 %v96
    %653 = vmatprep.subr.mxu0 0.0
    %654 = vmatpush1.msra.mxu0 %v97
    %655 = vmatprep.subr.mxu0 0.0
    %656 = vmatpush1.msra.mxu0 %v98
    %657 = vmatprep.subr.mxu0 0.0
    %658 = vmatpush1.msra.mxu0 %v99
    %659 = vmatprep.subr.mxu0 0.0
    %660 = vmatpush1.msra.mxu0 %v100
    %661 = vmatprep.subr.mxu0 0.0
    %662 = vmatpush1.msra.mxu0 %v101
    %663 = vmatprep.subr.mxu0 0.0
    %664 = vmatpush1.msra.mxu0 %v102
    %665 = vmatprep.subr.mxu0 0.0
    %666 = vmatpush1.msra.mxu0 %v103
    %667 = vmatprep.subr.mxu0 0.0
    %668 = vmatpush1.msra.mxu0 %v104
    %669 = vmatprep.subr.mxu0 0.0
    %670 = vmatpush1.msra.mxu0 %v105
    %671 = vmatprep.subr.mxu0 0.0
    %672 = vmatpush1.msra.mxu0 %v106
    %673 = vmatprep.subr.mxu0 0.0
    %674 = vmatpush1.msra.mxu0 %v107
    %675 = vmatprep.subr.mxu0 0.0
    %676 = vmatpush1.msra.mxu0 %v108
    %677 = vmatprep.subr.mxu0 0.0
    %678 = vmatpush1.msra.mxu0 %v109
    %679 = vmatprep.subr.mxu0 0.0
    %680 = vmatpush1.msra.mxu0 %v110
    %681 = vmatprep.subr.mxu0 0.0
    %682 = vmatpush1.msra.mxu0 %v111
    %683 = vmatprep.subr.mxu0 0.0
    %684 = vmatpush1.msra.mxu0 %v112
    %685 = vmatprep.subr.mxu0 0.0
    %686 = vmatpush1.msra.mxu0 %v113
    %687 = vmatprep.subr.mxu0 0.0
    %688 = vmatpush1.msra.mxu0 %v114
    %689 = vmatprep.subr.mxu0 0.0
    %690 = vmatpush1.msra.mxu0 %v115
    %691 = vmatprep.subr.mxu0 0.0
    %692 = vmatpush1.msra.mxu0 %v116
    %693 = vmatprep.subr.mxu0 0.0
    %694 = vmatpush1.msra.mxu0 %v117
    %695 = vmatprep.subr.mxu0 0.0
    %696 = vmatpush1.msra.mxu0 %v118
    %697 = vmatprep.mubr.f32.mxu0 %v537
    %698 = vmatmul.mubr.f32.gmra.mrb[0].mxu0 %v535
    %v699 = vpop.f32.mrb[0].mxu0
    %v700 = vadd.f32 %v630, %v699
    %v701 = vpop.f32.mrb[0].mxu0
    %702 = vdwg.mxu0
    %703 = vmatprep.subr.mxu0 0.0
    %704 = vmatpush1.msra.mxu0 %v119
    %705 = vmatprep.subr.mxu0 0.0
    %706 = vmatpush1.msra.mxu0 %v120
    %707 = vmatprep.subr.mxu0 0.0
    %708 = vmatpush1.msra.mxu0 %v121
    %709 = vmatprep.subr.mxu0 0.0
    %710 = vmatpush1.msra.mxu0 %v122
    %711 = vmatprep.subr.mxu0 0.0
    %712 = vmatpush1.msra.mxu0 %v123
    %713 = vmatprep.subr.mxu0 0.0
    %714 = vmatpush1.msra.mxu0 %v124
    %715 = vmatprep.subr.mxu0 0.0
    %716 = vmatpush1.msra.mxu0 %v125
    %717 = vmatprep.subr.mxu0 0.0
    %718 = vmatpush1.msra.mxu0 %v126
    %719 = vmatprep.subr.mxu0 0.0
    %720 = vmatpush1.msra.mxu0 %v127
    %721 = vmatprep.subr.mxu0 0.0
    %722 = vmatpush1.msra.mxu0 %v128
    %723 = vmatprep.subr.mxu0 0.0
    %724 = vmatpush1.msra.mxu0 %v129
    %725 = vmatprep.subr.mxu0 0.0
    %726 = vmatpush1.msra.mxu0 %v130
    %727 = vmatprep.subr.mxu0 0.0
    %728 = vmatpush1.msra.mxu0 %v131
    %729 = vmatprep.subr.mxu0 0.0
    %730 = vmatpush1.msra.mxu0 %v132
    %731 = vmatprep.subr.mxu0 0.0
    %732 = vmatpush1.msra.mxu0 %v133
    %733 = vmatprep.subr.mxu0 0.0
    %734 = vmatpush1.msra.mxu0 %v134
    %735 = vmatprep.subr.mxu0 0.0
    %736 = vmatpush1.msra.mxu0 %v135
    %737 = vmatprep.subr.mxu0 0.0
    %738 = vmatpush1.msra.mxu0 %v136
    %739 = vmatprep.subr.mxu0 0.0
    %740 = vmatpush1.msra.mxu0 %v137
    %741 = vmatprep.subr.mxu0 0.0
    %742 = vmatpush1.msra.mxu0 %v138
    %743 = vmatprep.subr.mxu0 0.0
    %744 = vmatpush1.msra.mxu0 %v139
    %745 = vmatprep.subr.mxu0 0.0
    %746 = vmatpush1.msra.mxu0 %v140
    %747 = vmatprep.subr.mxu0 0.0
    %748 = vmatpush1.msra.mxu0 %v141
    %749 = vmatprep.subr.mxu0 0.0
    %750 = vmatpush1.msra.mxu0 %v142
    %751 = vmatprep.subr.mxu0 0.0
    %752 = vmatpush1.msra.mxu0 %v143
    %753 = vmatprep.subr.mxu0 0.0
    %754 = vmatpush1.msra.mxu0 %v144
    %755 = vmatprep.subr.mxu0 0.0
    %756 = vmatpush1.msra.mxu0 %v145
    %757 = vmatprep.subr.mxu0 0.0
    %758 = vmatpush1.msra.mxu0 %v146
    %759 = vmatprep.subr.mxu0 0.0
    %760 = vmatpush1.msra.mxu0 %v147
    %761 = vmatprep.subr.mxu0 0.0
    %762 = vmatpush1.msra.mxu0 %v148
    %763 = vmatprep.subr.mxu0 0.0
    %764 = vmatpush1.msra.mxu0 %v149
    %765 = vmatprep.subr.mxu0 0.0
    %766 = vmatpush1.msra.mxu0 %v150
    %767 = vmatprep.mubr.f32.mxu0 %v553
    %768 = vmatmul.mubr.f32.gmra.mrb[0].mxu0 %v545
    %v769 = vpop.f32.mrb[0].mxu0
    %v770 = vadd.f32 %v700, %v769
    %v771 = vpop.f32.mrb[0].mxu0
    %772 = vdwg.mxu0
    %773 = vmatprep.subr.mxu0 0.0
    %774 = vmatpush1.msra.mxu0 %v151
    %775 = vmatprep.subr.mxu0 0.0
    %776 = vmatpush1.msra.mxu0 %v152
    %777 = vmatprep.subr.mxu0 0.0
    %778 = vmatpush1.msra.mxu0 %v153
    %779 = vmatprep.subr.mxu0 0.0
    %780 = vmatpush1.msra.mxu0 %v154
    %781 = vmatprep.subr.mxu0 0.0
    %782 = vmatpush1.msra.mxu0 %v155
    %783 = vmatprep.subr.mxu0 0.0
    %784 = vmatpush1.msra.mxu0 %v156
    %785 = vmatprep.subr.mxu0 0.0
    %786 = vmatpush1.msra.mxu0 %v157
    %787 = vmatprep.subr.mxu0 0.0
    %788 = vmatpush1.msra.mxu0 %v158
    %789 = vmatprep.subr.mxu0 0.0
    %790 = vmatpush1.msra.mxu0 %v159
    %791 = vmatprep.subr.mxu0 0.0
    %792 = vmatpush1.msra.mxu0 %v160
    %793 = vmatprep.subr.mxu0 0.0
    %794 = vmatpush1.msra.mxu0 %v161
    %795 = vmatprep.subr.mxu0 0.0
    %796 = vmatpush1.msra.mxu0 %v162
    %797 = vmatprep.subr.mxu0 0.0
    %798 = vmatpush1.msra.mxu0 %v163
    %799 = vmatprep.subr.mxu0 0.0
    %800 = vmatpush1.msra.mxu0 %v164
    %801 = vmatprep.subr.mxu0 0.0
    %802 = vmatpush1.msra.mxu0 %v165
    %803 = vmatprep.subr.mxu0 0.0
    %804 = vmatpush1.msra.mxu0 %v166
    %805 = vmatprep.subr.mxu0 0.0
    %806 = vmatpush1.msra.mxu0 %v167
    %807 = vmatprep.subr.mxu0 0.0
    %808 = vmatpush1.msra.mxu0 %v168
    %809 = vmatprep.subr.mxu0 0.0
    %810 = vmatpush1.msra.mxu0 %v169
    %811 = vmatprep.subr.mxu0 0.0
    %812 = vmatpush1.msra.mxu0 %v170
    %813 = vmatprep.subr.mxu0 0.0
    %814 = vmatpush1.msra.mxu0 %v171
    %815 = vmatprep.subr.mxu0 0.0
    %816 = vmatpush1.msra.mxu0 %v172
    %817 = vmatprep.subr.mxu0 0.0
    %818 = vmatpush1.msra.mxu0 %v173
    %819 = vmatprep.subr.mxu0 0.0
    %820 = vmatpush1.msra.mxu0 %v174
    %821 = vmatprep.subr.mxu0 0.0
    %822 = vmatpush1.msra.mxu0 %v175
    %823 = vmatprep.subr.mxu0 0.0
    %824 = vmatpush1.msra.mxu0 %v176
    %825 = vmatprep.subr.mxu0 0.0
    %826 = vmatpush1.msra.mxu0 %v177
    %827 = vmatprep.subr.mxu0 0.0
    %828 = vmatpush1.msra.mxu0 %v178
    %829 = vmatprep.subr.mxu0 0.0
    %830 = vmatpush1.msra.mxu0 %v179
    %831 = vmatprep.subr.mxu0 0.0
    %832 = vmatpush1.msra.mxu0 %v180
    %833 = vmatprep.subr.mxu0 0.0
    %834 = vmatpush1.msra.mxu0 %v181
    %835 = vmatprep.subr.mxu0 0.0
    %836 = vmatpush1.msra.mxu0 %v182
    %837 = vmatprep.mubr.f32.mxu0 %v554
    %838 = vmatmul.mubr.f32.gmra.mrb[0].mxu0 %v552
    %v839 = vpop.f32.mrb[0].mxu0
    %v840 = vadd.f32 %v770, %v839
    %v841 = vpop.f32.mrb[0].mxu0
    %842 = vdwg.mxu0
    %s843 = scalar_lea.vmem [#allocation8], 2
    %844 = vst [vmem:[%s843] sm:$0x3] %v840
    // Predicated region
    $region30: #{tpu_custom_call.1} parent=1 // pred_check
      _
    $region31: #{tpu_custom_call.1} parent=1 // pred_check_branch
      %846 = sbr.rel (0) target = $region33
    $region32: #{tpu_custom_call.1} parent=1 // pred_region
      %s848 = ssub.s32 64, 64
      %849 = vsyncadd [#allocation4], %s848
      %s850 = sshll.u32 [#allocation8], 4
      %s851 = int_to_ptr.vmem [resolvable:$true] %s850
      %856 = dma.vmem_to_hbm [thread:$0]  %s851, 64, %s4, [#allocation4], 32, 32, 2
    $region33: #{tpu_custom_call.1} parent=1 // pred_fallthru
      _
    // Predicated region
    $region34: #{tpu_custom_call.1} parent=1 // pred_check
      _
    $region35: #{tpu_custom_call.1} parent=1 // pred_check_branch
      %858 = sbr.rel (0) target = $region37
    $region36: #{tpu_custom_call.1} parent=1 // pred_region
      %859 = dma.done [#allocation4], 64
    $region37: #{tpu_custom_call.1} parent=1 // pred_fallthru
      _
    %860 = vsyncpa [#allocation3], 1
    %861 = vsyncpa [#allocation6], 1
    %862 = vsyncpa [#allocation4], 1

</llo_original>
